<compile_context>
chip_gen: v7x
topology: tpu7x:2x2x1
jax: 0.10.0
libtpu: 0.0.40
codegen_flags: <defaults>
</compile_context>

<pallas_src>
import jax
import jax.numpy as jnp
from jax.experimental import pallas as pl
from jax.experimental.pallas import tpu as pltpu


def _round_up(x, m):
    return ((x + m - 1) // m) * m


# ----------------------------------------------------------------------------
# Kernel 1: pointwise conv (+bias+ReLU) over lane-packed channels-last pixels
# ----------------------------------------------------------------------------
def _linear_bias_relu_kernel(x_ref, w_ref, b_ref, o_ref):
    y = jnp.dot(x_ref[...], w_ref[...], preferred_element_type=jnp.float32)
    y = jnp.maximum(y + b_ref[...], 0.0)
    o_ref[...] = y.astype(o_ref.dtype)


def pointwise_conv_relu(x, w, b, *, tile_m=1024, out_dtype=jnp.bfloat16):
    """x: (M, K) bf16 pixel rows; w: (K, N) bf16; b: (1, N) f32 -> (M, N)."""
    M, K = x.shape
    N = w.shape[1]
    tile_m = min(tile_m, _round_up(M, 16))
    m_pad = _round_up(M, tile_m)
    if m_pad != M:
        x = jnp.pad(x, ((0, m_pad - M), (0, 0)))
    out = pl.pallas_call(
        _linear_bias_relu_kernel,
        out_shape=jax.ShapeDtypeStruct((m_pad, N), out_dtype),
        grid=(m_pad // tile_m,),
        in_specs=[
            pl.BlockSpec((tile_m, K), lambda i: (i, 0)),
            pl.BlockSpec((K, N), lambda i: (0, 0)),
            pl.BlockSpec((1, N), lambda i: (0, 0)),
        ],
        out_specs=pl.BlockSpec((tile_m, N), lambda i: (i, 0)),
        compiler_params=pltpu.CompilerParams(dimension_semantics=("parallel",)),
    )(x, w, b)
    return out[:M]


# ----------------------------------------------------------------------------
# i3d stand-in backbone -> channels-last per-frame feature maps (B*T, FH, FW, C)
# ----------------------------------------------------------------------------
# TODO(synk): i3d_noglobal is an external dependency; approximated here by a 4x4
#             spatial average pool + pointwise (1x1) conv + ReLU.
# TODO(synk): the pool + NCHW->NHWC relayout is left in XLA for this stub; fuse
#             it into the Pallas kernel when the real i3d backbone is ported.
def i3d_stub(img, w, b, *, pool=4):
    B, T, C, H, W = img.shape
    BT = B * T
    FH, FW = H // pool, W // pool
    hidden = w.shape[1]
    k0 = _round_up(C, 8)

    x = img.reshape(BT, C, FH, pool, FW, pool).mean(axis=(3, 5))      # (BT, C, FH, FW)
    x = jnp.transpose(x, (0, 2, 3, 1)).reshape(BT * FH * FW, C)       # (M, C)
    M = x.shape[0]
    x = jnp.pad(x, ((0, 0), (0, k0 - C)))
    w_pad = jnp.zeros((k0, hidden), jnp.float32).at[:C, :].set(w)

    # Lane-dense packing: group `pack` consecutive pixels per matmul row so the
    # kernel output last dim is pack*hidden == 128 (unmasked stores; the reshape
    # back is free because the row-major HBM bytes are identical).  When pack==1
    # (hidden >= 128 or not a divisor of 128) feed (M, k0)x(k0, N) directly with
    # N padded to a multiple of 128 so stores stay lane-dense on v5e.
    pack = 128 // hidden if (hidden <= 128 and 128 % hidden == 0) else 1
    if M % pack != 0:
        pack = 1

    if pack > 1:
        x = x.reshape(M // pack, pack * k0).astype(jnp.bfloat16)
        w_bd = jnp.kron(jnp.eye(pack, dtype=jnp.float32), w_pad).astype(jnp.bfloat16)
        b_pk = jnp.tile(b, (1, pack))                                  # f32 (1, pack*hidden)
        y = pointwise_conv_relu(x, w_bd, b_pk)                         # (M//pack, 128) bf16
        y = y.reshape(BT, FH, FW, hidden)
    else:
        n_pad = _round_up(hidden, 128)
        w_mat = jnp.pad(w_pad, ((0, 0), (0, n_pad - hidden))).astype(jnp.bfloat16)
        b_mat = jnp.pad(b, ((0, 0), (0, n_pad - hidden)))
        y = pointwise_conv_relu(x.astype(jnp.bfloat16), w_mat, b_mat)  # (M, n_pad) bf16
        y = y[:, :hidden].reshape(BT, FH, FW, hidden)
    return y                                                           # channels-last


# ----------------------------------------------------------------------------
# Kernel 2: RoIAlign (bilinear, aligned=False, fixed sampling grid),
#           frame-batched + separable weights.
# ----------------------------------------------------------------------------
# TODO(synk): sampling_ratio=-1 is data-dependent per ROI; a fixed 2x2 sample
#             grid per bin is used instead (static shapes required on TPU).
def _interp_matrix(lo, bin_sz, n_bins, n_src, sampling=2):
    """Per-ROI 1-D bilinear interp + bin-average weights: (R, n_bins, n_src)."""
    g = (jnp.arange(n_bins * sampling, dtype=jnp.float32) + 0.5) / sampling
    s = jnp.clip(lo[:, None] + g[None, :] * bin_sz[:, None], 0.0, n_src - 1.0)
    s0 = jnp.floor(s)
    frac = s - s0
    s1 = jnp.minimum(s0 + 1.0, n_src - 1.0)
    src = jnp.arange(n_src, dtype=jnp.float32)
    w = ((1.0 - frac)[..., None] * (src[None, None, :] == s0[..., None]) +
         frac[..., None] * (src[None, None, :] == s1[..., None]))
    R = lo.shape[0]
    return w.reshape(R, n_bins, sampling, n_src).mean(axis=2)


def roi_align_pallas(feat3, wy_s, wx_rh, *, T, crop_h, crop_w,
                     out_dtype=jnp.bfloat16):
    """Frame-batched separable RoIAlign.

    feat3 : (Nf, FH, FW*C) bf16   per-frame channels-last feature map
    wy_s  : (B, n_max*crop_h, FH) bf16   stacked per-ROI row weights (per batch)
    wx_rh : (B, n_max*crop_h, crop_w, FW) bf16   per-ROI col weights, broadcast
            over crop_h so it batches with the first matmul's rows
    returns (Nf, n_max, crop_h*crop_w*C) bf16, (h, w, c)-ordered per-ROI flatten
    """
    Nf, FH, FWC = feat3.shape
    B, NBch, _ = wy_s.shape
    _, _, cw, FW = wx_rh.shape
    C = FWC // FW
    NB = NBch // crop_h
    P = crop_h * crop_w

    def kernel(feat_ref, wy_ref, wx_ref, o_ref):
        # One frame per grid step; every ROI of this frame handled at once.
        # matmul 1 (stacked over ROIs): contract FH.
        t = jnp.dot(wy_ref[0], feat_ref[0],
                    preferred_element_type=jnp.float32)      # (NB*ch, FW*C)
        t = t.reshape(NBch, FW, C).astype(jnp.bfloat16)
        # matmul 2 (batched over (ROI, h)): contract FW.
        o = jnp.einsum("bwj,bjc->bwc", wx_ref[0], t,
                       preferred_element_type=jnp.float32)   # (NB*ch, cw, C)
        o_ref[...] = o.reshape(1, NB, P * C).astype(o_ref.dtype)

    flops = Nf * (2 * NBch * FH * FWC + 2 * NBch * cw * FW * C)
    bytes_acc = (feat3.size * 2 + Nf * (NBch * FH + NBch * cw * FW) * 2
                 + Nf * NB * P * C * 2)
    return pl.pallas_call(
        kernel,
        out_shape=jax.ShapeDtypeStruct((Nf, NB, P * C), out_dtype),
        grid=(Nf,),
        in_specs=[
            pl.BlockSpec((1, FH, FWC), lambda f: (f, 0, 0)),
            pl.BlockSpec((1, NBch, FH), lambda f: (f // T, 0, 0)),
            pl.BlockSpec((1, NBch, cw, FW), lambda f: (f // T, 0, 0, 0)),
        ],
        out_specs=pl.BlockSpec((1, NB, P * C), lambda f: (f, 0, 0)),
        compiler_params=pltpu.CompilerParams(
            dimension_semantics=("parallel",),          # frames independent (v7x 2-TC)
            vmem_limit_bytes=32 * 1024 * 1024),         # fits v7x scoped default
        cost_estimate=pl.CostEstimate(flops=int(flops), transcendentals=0,
                                      bytes_accessed=int(bytes_acc)),
    )(feat3, wy_s, wx_rh)


# ----------------------------------------------------------------------------
# Kernel 3: bbox_fc = Linear(D_in -> 1024) -> Linear(1024 -> hidden), fused,
#           K-tiled first matmul with an f32 VMEM accumulator.
# ----------------------------------------------------------------------------
def _mlp2_kernel(x_ref, w1_ref, b1_ref, w2_ref, b2_ref, o_ref, h_acc):
    k = pl.program_id(1)

    @pl.when(k == 0)
    def _():
        h_acc[...] = jnp.zeros_like(h_acc)

    h_acc[...] += jnp.dot(x_ref[...], w1_ref[...],
                          preferred_element_type=jnp.float32)

    @pl.when(k == pl.num_programs(1) - 1)
    def _():
        # bbox_fc has NO nonlinearity between the two Linear layers.
        h = (h_acc[...] + b1_ref[...]).astype(jnp.bfloat16)
        y = jnp.dot(h, w2_ref[...], preferred_element_type=jnp.float32) + b2_ref[...]
        o_ref[...] = y.astype(o_ref.dtype)


def bbox_fc_pallas(x, w1, b1, w2, b2, n_out, *, tile_m=512, tile_k=1024):
    """x: (R, D_in) bf16/f32 -> (R, n_out) f32.  R, D_in, n_out padded internally."""
    R, D = x.shape
    H1 = w1.shape[1]
    n_pad = _round_up(n_out, 128)                 # lane-dense output (zero cols sliced off)
    tile_m = min(tile_m, _round_up(R, 16))        # single row tile at small/medium R
    r_pad = _round_up(R, tile_m)
    tile_k = min(tile_k, _round_up(D, 128))
    d_pad = _round_up(D, tile_k)

    x_p = jnp.pad(x, ((0, r_pad - R), (0, d_pad - D))).astype(jnp.bfloat16)
    w1_p = jnp.pad(w1, ((0, d_pad - D), (0, 0))).astype(jnp.bfloat16)
    w2_p = jnp.pad(w2, ((0, 0), (0, n_pad - n_out))).astype(jnp.bfloat16)
    b2_p = jnp.pad(b2, ((0, 0), (0, n_pad - n_out)))

    flops = 2 * r_pad * d_pad * H1 + 2 * r_pad * H1 * n_pad
    bytes_acc = (x_p.size * 2 + w1_p.size * 2 + w2_p.size * 2
                 + b1.size * 4 + b2_p.size * 4 + r_pad * n_pad * 4)

    out = pl.pallas_call(
        _mlp2_kernel,
        out_shape=jax.ShapeDtypeStruct((r_pad, n_pad), jnp.float32),
        grid=(r_pad // tile_m, d_pad // tile_k),
        in_specs=[
            pl.BlockSpec((tile_m, tile_k), lambda i, k: (i, k)),
            pl.BlockSpec((tile_k, H1), lambda i, k: (k, 0)),
            pl.BlockSpec((1, H1), lambda i, k: (0, 0)),
            pl.BlockSpec((H1, n_pad), lambda i, k: (0, 0)),
            pl.BlockSpec((1, n_pad), lambda i, k: (0, 0)),
        ],
        out_specs=pl.BlockSpec((tile_m, n_pad), lambda i, k: (i, 0)),
        scratch_shapes=[pltpu.VMEM((tile_m, H1), jnp.float32)],
        compiler_params=pltpu.CompilerParams(
            dimension_semantics=("parallel", "arbitrary")),
        cost_estimate=pl.CostEstimate(flops=int(flops), transcendentals=0,
                                      bytes_accessed=int(bytes_acc)),
    )(x_p, w1_p, b1, w2_p, b2_p)
    return out[:R, :n_out]


# ----------------------------------------------------------------------------
# Full BackboneI3D forward
# ----------------------------------------------------------------------------
def backbone_i3d_forward(params, img, bbox, valid_areas_b, meta,
                         *, crop_h, crop_w, hidden_dim, sampling=2):
    B, T, C, H, W = img.shape

    # i3d backbone (stand-in) -> channels-last per-frame feature maps
    feat = i3d_stub(img, params["i3d_w"], params["i3d_b"])            # (B*T, FH, FW, hid) bf16
    BT, FH, FW, C_o = feat.shape

    OH, OW = meta[0]["frame_size"]
    H_ratio = FH / OH
    W_ratio = FW / OW
    scale = jnp.array([W_ratio, H_ratio, W_ratio, H_ratio], jnp.float32)

    # Host bookkeeping: ROI boxes in original order + per-batch padded boxes
    # (static sizes from valid_areas_b).
    all_rois, rois_list, n_per_frame = [], [], []
    n_max = 0
    for i, va in enumerate(valid_areas_b):
        r0, r1, c0, c1 = va
        rois = bbox[i, r0:r1, c0:c1] * scale                          # (n, 4) feature coords
        n = rois.shape[0]
        n_per_frame.append(n)
        n_max = max(n_max, n)
        rois_list.append(rois)
        rois_rep = jnp.repeat(rois, T, axis=0)                        # repeat_interleave(T)
        fid = i * T + jnp.tile(jnp.arange(T, dtype=jnp.float32), n)   # (n*T,)
        all_rois.append(jnp.concatenate([fid[:, None], rois_rep], axis=1))
    roi_boxes = jnp.concatenate(all_rois, axis=0)                     # (R, 5)
    R = roi_boxes.shape[0]

    boxes_pad = jnp.zeros((B, n_max, 4), jnp.float32)
    for i, rois in enumerate(rois_list):
        boxes_pad = boxes_pad.at[i, :rois.shape[0]].set(rois)

    # Separable per-ROI bilinear weights (tiny, XLA); padded slots never read.
    x1 = boxes_pad[..., 0].reshape(-1)
    y1 = boxes_pad[..., 1].reshape(-1)
    x2 = boxes_pad[..., 2].reshape(-1)
    y2 = boxes_pad[..., 3].reshape(-1)
    bin_w = jnp.maximum(x2 - x1, 1.0) / crop_w
    bin_h = jnp.maximum(y2 - y1, 1.0) / crop_h
    wy = _interp_matrix(y1, bin_h, crop_h, FH, sampling).reshape(B, n_max, crop_h, FH)
    wx = _interp_matrix(x1, bin_w, crop_w, FW, sampling).reshape(B, n_max, crop_w, FW)

    wy_s = wy.reshape(B, n_max * crop_h, FH).astype(jnp.bfloat16)
    wx_rh = jnp.broadcast_to(
        wx[:, :, None], (B, n_max, crop_h, crop_w, FW)
    ).reshape(B, n_max * crop_h, crop_w, FW).astype(jnp.bfloat16)

    # Frame-batched RoIAlign: one grid step per frame, feat DMA'd once per frame.
    feat3 = feat.reshape(BT, FH, FW * C_o)
    roi_out = roi_align_pallas(feat3, wy_s, wx_rh,
                               T=T, crop_h=crop_h, crop_w=crop_w)     # (BT, n_max, P*C) bf16

    # Gather rows back into the original ROI order (static host indices).
    frame_idx, slot_idx = [], []
    for i, n in enumerate(n_per_frame):
        for bslot in range(n):
            for t in range(T):
                frame_idx.append(i * T + t)
                slot_idx.append(bslot)
    frame_idx = jnp.asarray(frame_idx, jnp.int32)
    slot_idx = jnp.asarray(slot_idx, jnp.int32)
    boxes_features = roi_out[frame_idx, slot_idx]                     # (R, ch*cw*C) bf16

    # bbox_fc: Linear -> Linear (fc1_w rows are ordered for the (h,w,c) flatten).
    boxes_features = bbox_fc_pallas(
        boxes_features, params["fc1_w"], params["fc1_b"],
        params["fc2_w"], params["fc2_b"], hidden_dim)                 # (R, hidden) f32
    boxes_features = boxes_features.reshape(-1, T, hidden_dim)

    # pad per-batch boxes to n_max, build mask (static host loop)
    boxes_features_padding = jnp.zeros((B * n_max, T, hidden_dim), jnp.float32)
    mask = jnp.ones((B, T, n_max), dtype=jnp.bool_)
    start = 0
    for i, n in enumerate(n_per_frame):
        boxes_features_padding = boxes_features_padding.at[
            i * n_max:i * n_max + n].set(boxes_features[start:start + n])
        mask = mask.at[i, :, :n].set(False)
        start += n

    boxes_features_padding = (
        boxes_features_padding.reshape(B, n_max, T, hidden_dim)
        .transpose(0, 2, 1, 3)
        .reshape(B * T, n_max, hidden_dim)
        .transpose(1, 0, 2))                                          # (n_max, B*T, hidden)
    mask = mask.reshape(B * T, n_max)

    return roi_boxes, boxes_features_padding, mask, n_max, n_per_frame, (FH, FW)


# ----------------------------------------------------------------------------
# Deterministic parameter init
# ----------------------------------------------------------------------------
def init_params(key, in_channels, hidden_dim, crop_h, crop_w):
    k1, k2, k3, k4, k5 = jax.random.split(key, 5)
    d_in = hidden_dim * crop_h * crop_w
    params = {
        "i3d_w": jax.random.normal(k1, (in_channels, hidden_dim), jnp.float32)
                 / jnp.sqrt(in_channels),
        "i3d_b": 0.01 * jax.random.normal(k2, (1, hidden_dim), jnp.float32),
        "fc1_w": jax.random.normal(k3, (d_in, 1024), jnp.float32) / jnp.sqrt(d_in),
        "fc1_b": 0.01 * jax.random.normal(k4, (1, 1024), jnp.float32),
        "fc2_w": jax.random.normal(k5, (1024, hidden_dim), jnp.float32) / jnp.sqrt(1024.0),
        "fc2_b": jnp.zeros((1, hidden_dim), jnp.float32),
    }
    # NOTE: input_proj (1x1 Conv2d) is defined in __init__ but never used in forward.
    return params


if __name__ == "__main__":
    B, T, C, H, W = 2, 4, 3, 32, 32
    hidden_dim, crop_h, crop_w = 32, 4, 4

    key = jax.random.PRNGKey(0)
    k_img, k_par = jax.random.split(key)
    img = jax.random.normal(k_img, (B, T, C, H, W), jnp.float32)

    # (B, max_boxes, 4) boxes in original-frame pixel coords [x1, y1, x2, y2]
    bbox = jnp.array(
        [[[2.0, 3.0, 14.0, 20.0],
          [5.0, 6.0, 25.0, 28.0],
          [10.0, 1.0, 30.0, 15.0],
          [0.0, 0.0, 0.0, 0.0],
          [0.0, 0.0, 0.0, 0.0]],
         [[1.0, 2.0, 20.0, 22.0],
          [8.0, 9.0, 28.0, 30.0],
          [0.0, 0.0, 0.0, 0.0],
          [0.0, 0.0, 0.0, 0.0],
          [0.0, 0.0, 0.0, 0.0]]], dtype=jnp.float32)
    valid_areas_b = [(0, 3, 0, 4), (0, 2, 0, 4)]   # host metadata (row/col slices)
    meta = [{"frame_size": (H, W)}]

    params = init_params(k_par, C, hidden_dim, crop_h, crop_w)

    out = backbone_i3d_forward(params, img, bbox, valid_areas_b, meta,
                               crop_h=crop_h, crop_w=crop_w, hidden_dim=hidden_dim)
    roi_boxes, feats_pad, mask, n_max, n_per_frame, (FH, FW) = out
    jax.block_until_ready((roi_boxes, feats_pad, mask))

    assert roi_boxes.shape == (sum(n_per_frame) * T, 5)
    assert feats_pad.shape == (n_max, B * T, hidden_dim)
    assert mask.shape == (B * T, n_max)
    print("KERNEL_OK")
</pallas_src>

<mosaic_0001>
module attributes {stable_mosaic.version = 11 : i64} {
  func.func @_linear_bias_relu_kernel(%arg0: i32, %arg1: memref<128x32xbf16, #tpu.memory_space<vmem>>, %arg2: memref<32x128xbf16, #tpu.memory_space<vmem>>, %arg3: memref<1x128xf32, #tpu.memory_space<vmem>>, %arg4: memref<128x128xbf16, #tpu.memory_space<vmem>>) attributes {dimension_semantics = [#tpu.dimension_semantics<parallel>], iteration_bounds = array<i64: 1>, scalar_prefetch = 0 : i64, scratch_operands = 0 : i64, tpu.core_type = #tpu.core_type<tc>, window_params = [{transform_indices = @transform_0, window_bounds = array<i64: 128, 32>}, {pipeline_mode = #tpu.pipeline_mode<synchronous>, transform_indices = @transform_1, window_bounds = array<i64: 32, 128>}, {pipeline_mode = #tpu.pipeline_mode<synchronous>, transform_indices = @transform_2, window_bounds = array<i64: 1, 128>}, {transform_indices = @transform_3, window_bounds = array<i64: 128, 128>}]} {
    %c0 = arith.constant 0 : index
    %c0_0 = arith.constant 0 : index
    %0 = vector.load %arg1[%c0, %c0_0] : memref<128x32xbf16, #tpu.memory_space<vmem>>, vector<128x32xbf16>
    %c0_1 = arith.constant 0 : index
    %c0_2 = arith.constant 0 : index
    %1 = vector.load %arg2[%c0_1, %c0_2] : memref<32x128xbf16, #tpu.memory_space<vmem>>, vector<32x128xbf16>
    %cst = arith.constant dense<0.000000e+00> : vector<128x128xf32>
    %2 = tpu.matmul %0, %1, %cst {dimension_numbers = #tpu.dot_dimension_numbers<[1], [0], [0], [1], [0, 0, 1, 1], [], []>} : vector<128x32xbf16>, vector<32x128xbf16>, vector<128x128xf32> -> vector<128x128xf32>
    %c0_3 = arith.constant 0 : index
    %c0_4 = arith.constant 0 : index
    %3 = vector.load %arg3[%c0_3, %c0_4] : memref<1x128xf32, #tpu.memory_space<vmem>>, vector<1x128xf32>
    %4 = vector.broadcast %3 : vector<1x128xf32> to vector<128x128xf32>
    %5 = arith.addf %2, %4 : vector<128x128xf32>
    %cst_5 = arith.constant 0.000000e+00 : f32
    %6 = vector.broadcast %cst_5 : f32 to vector<128x128xf32>
    %7 = arith.maximumf %5, %6 : vector<128x128xf32>
    %8 = arith.truncf %7 : vector<128x128xf32> to vector<128x128xbf16>
    %c0_6 = arith.constant 0 : index
    %c0_7 = arith.constant 0 : index
    %9 = vector.load %arg4[%c0_6, %c0_7] : memref<128x128xbf16, #tpu.memory_space<vmem>>, vector<128x128xbf16>
    tpu.vector_store %arg4[%c0_6, %c0_7], %8 {strides = array<i32>} : memref<128x128xbf16, #tpu.memory_space<vmem>>, vector<128x128xbf16>,
    return
  }
  func.func @transform_0(%arg0: i32) -> (i32, i32) {
    %c0_i32 = arith.constant 0 : i32
    %c0_i32_0 = arith.constant 0 : i32
    return %arg0, %c0_i32 : i32, i32
  }
  func.func @transform_1(%arg0: i32) -> (i32, i32) {
    %c0_i32 = arith.constant 0 : i32
    %c0_i32_0 = arith.constant 0 : i32
    %c0_i32_1 = arith.constant 0 : i32
    return %c0_i32, %c0_i32_0 : i32, i32
  }
  func.func @transform_2(%arg0: i32) -> (i32, i32) {
    %c0_i32 = arith.constant 0 : i32
    %c0_i32_0 = arith.constant 0 : i32
    %c0_i32_1 = arith.constant 0 : i32
    return %c0_i32, %c0_i32_0 : i32, i32
  }
  func.func @transform_3(%arg0: i32) -> (i32, i32) {
    %c0_i32 = arith.constant 0 : i32
    %c0_i32_0 = arith.constant 0 : i32
    return %arg0, %c0_i32 : i32, i32
  }
}

</mosaic_0001>

<llo_original>
// kernel: tpu_custom_call.1
$region0: #{tpu_custom_call.1}
  #allocation0 [shape = 'u32[]', space=smem, size = 0x4, offset = 0x4, fixed_abs, tag = 'smem constant byte address 0x4 - core index']
  #allocation1 [shape = 'u32[144,128]{1,0:T(1,128)}', space=vmem, size = 0x12000, scoped, tag = 'internal scratch']
  %s0 = inlined_call_operand.vmem [shape: bf16[128,32], index: 0, kind: input, shape index: {}]
  %s1 = inlined_call_operand.vmem [shape: bf16[32,128], index: 1, kind: input, shape index: {}]
  %s2 = inlined_call_operand.vmem [shape: f32[1,128], index: 2, kind: input, shape index: {}]
  %s3 = inlined_call_operand.hbm [shape: bf16[128,128], index: 3, kind: output, shape index: {}]
  %s4 = sld [smem:[#allocation0]]
  $region22: #{tpu_custom_call.1} parent=0
    _
  %s6 = ssub.s32 1, %s4
  %s7 = scalar_select 0, %s6, %s4
  $region1: #{tpu_custom_call.1} parent=0
    #allocation2 [shape = 'u8[32768]{0}', space=vmem, size = 0x8000, scoped, tag = 'output window, operand 0, single buffered']
    #allocation3 [shape = 's32[1]{0}', space=sflag, size = 0x4, scoped, tag = 'scoped memory for tpu_custom_call.1']
    %8 = vsyncpa [#allocation3], 0
    // Predicated region
    $region2: #{tpu_custom_call.1} parent=1 // pred_check
      _
    $region3: #{tpu_custom_call.1} parent=1 // pred_check_branch
      %10 = sbr.rel (0) target = $region5
    $region4: #{tpu_custom_call.1} parent=1 // pred_region
      _
    $region5: #{tpu_custom_call.1} parent=1 // pred_fallthru
      _
    // Predicated region
    $region6: #{tpu_custom_call.1} parent=1 // pred_check
      _
    $region7: #{tpu_custom_call.1} parent=1 // pred_check_branch
      %12 = sbr.rel (0) target = $region9
    $region8: #{tpu_custom_call.1} parent=1 // pred_region
      _
    $region9: #{tpu_custom_call.1} parent=1 // pred_fallthru
      _
    // Predicated region
    $region10: #{tpu_custom_call.1} parent=1 // pred_check
      _
    $region11: #{tpu_custom_call.1} parent=1 // pred_check_branch
      %14 = sbr.rel (0) target = $region13
    $region12: #{tpu_custom_call.1} parent=1 // pred_region
      _
    $region13: #{tpu_custom_call.1} parent=1 // pred_fallthru
      _
    %v16 = vld [vmem:[%s0] sm:$0xf]
    %v17 = vld [vmem:[%s0 + $0x4] sm:$0xf]
    %v18 = vld [vmem:[%s0 + $0x8] sm:$0xf]
    %v19 = vld [vmem:[%s0 + $0xc] sm:$0xf]
    %v20 = vld [vmem:[%s0 + $0x10] sm:$0xf]
    %v21 = vld [vmem:[%s0 + $0x14] sm:$0xf]
    %v22 = vld [vmem:[%s0 + $0x18] sm:$0xf]
    %v23 = vld [vmem:[%s0 + $0x1c] sm:$0xf]
    %v24 = vld [vmem:[%s0 + $0x20] sm:$0xf]
    %v25 = vld [vmem:[%s0 + $0x24] sm:$0xf]
    %v26 = vld [vmem:[%s0 + $0x28] sm:$0xf]
    %v27 = vld [vmem:[%s0 + $0x2c] sm:$0xf]
    %v28 = vld [vmem:[%s0 + $0x30] sm:$0xf]
    %v29 = vld [vmem:[%s0 + $0x34] sm:$0xf]
    %v30 = vld [vmem:[%s0 + $0x38] sm:$0xf]
    %v31 = vld [vmem:[%s0 + $0x3c] sm:$0xf]
    %v32 = vld [vmem:[%s1] sm:$0xf]
    %v33 = vld [vmem:[%s1 + $0x4] sm:$0xf]
    %v34 = vld [vmem:[%s1 + $0x8] sm:$0xf]
    %v35 = vld [vmem:[%s1 + $0xc] sm:$0xf]
    %v36 = vld [vmem:[%s2] sm:$0x1]
    %v38 = vlaneseq
    %v39 = vshrl.u32 %v38, 7
    %v40 = vsub.s32 0, %v39
    %v41 = vrot.slane %v36, %v40
    %v59 = vunpack.c.l.b16 %v16
    %v60 = vunpack.c.l.b16 %v17
    %v61 = vunpack.c.l.b16 %v18
    %v62 = vunpack.c.l.b16 %v19
    %v63 = vunpack.c.l.b16 %v20
    %v64 = vunpack.c.l.b16 %v21
    %v65 = vunpack.c.l.b16 %v22
    %v66 = vunpack.c.l.b16 %v23
    %v67 = vunpack.c.l.b16 %v24
    %v68 = vunpack.c.l.b16 %v25
    %v69 = vunpack.c.l.b16 %v26
    %v70 = vunpack.c.l.b16 %v27
    %v71 = vunpack.c.l.b16 %v28
    %v72 = vunpack.c.l.b16 %v29
    %v73 = vunpack.c.l.b16 %v30
    %v74 = vunpack.c.l.b16 %v31
    %v75 = vpack.c.b16 %v60, %v59
    %v76 = vpack.c.b16 %v62, %v61
    %v77 = vpack.c.b16 %v64, %v63
    %v78 = vpack.c.b16 %v66, %v65
    %v79 = vpack.c.b16 %v68, %v67
    %v80 = vpack.c.b16 %v70, %v69
    %v81 = vpack.c.b16 %v72, %v71
    %v82 = vpack.c.b16 %v74, %v73
    %v87 = vunpack.c.l.b16 %v32
    %v88 = vunpack.c.l.b16 %v33
    %v89 = vunpack.c.l.b16 %v34
    %v90 = vunpack.c.l.b16 %v35
    %v91 = vpack.c.b16 %v88, %v87
    %v92 = vpack.c.b16 %v90, %v89
    %vm95 = vcmask 261120
    %v97 = vsel %vm95, %v75, 0
    %v100 = vsel %vm95, %v76, 0
    %v103 = vsel %vm95, %v77, 0
    %v106 = vsel %vm95, %v78, 0
    %v109 = vsel %vm95, %v79, 0
    %v112 = vsel %vm95, %v80, 0
    %v115 = vsel %vm95, %v81, 0
    %v118 = vsel %vm95, %v82, 0
    %120 = vmatprep.subr.bf16.mxu0 0
    %121 = vmatpush1.bf16.msra.mxu0 %v91
    %122 = vmatprep.subr.bf16.mxu0 0
    %123 = vmatpush1.bf16.msra.mxu0 %v92
    %124 = vmatprep.subr.bf16.mxu0 0
    %125 = vmatpush1.bf16.msra.mxu0 0
    %126 = vmatprep.subr.bf16.mxu0 0
    %127 = vmatpush1.bf16.msra.mxu0 0
    %128 = vmatprep.subr.bf16.mxu0 0
    %129 = vmatpush1.bf16.msra.mxu0 0
    %130 = vmatprep.subr.bf16.mxu0 0
    %131 = vmatpush1.bf16.msra.mxu0 0
    %132 = vmatprep.subr.bf16.mxu0 0
    %133 = vmatpush1.bf16.msra.mxu0 0
    %134 = vmatprep.subr.bf16.mxu0 0
    %135 = vmatpush1.bf16.msra.mxu0 0
    %136 = vmatprep.subr.bf16.mxu0 0
    %137 = vmatpush1.bf16.msra.mxu0 0
    %138 = vmatprep.subr.bf16.mxu0 0
    %139 = vmatpush1.bf16.msra.mxu0 0
    %140 = vmatprep.subr.bf16.mxu0 0
    %141 = vmatpush1.bf16.msra.mxu0 0
    %142 = vmatprep.subr.bf16.mxu0 0
    %143 = vmatpush1.bf16.msra.mxu0 0
    %144 = vmatprep.subr.bf16.mxu0 0
    %145 = vmatpush1.bf16.msra.mxu0 0
    %146 = vmatprep.subr.bf16.mxu0 0
    %147 = vmatpush1.bf16.msra.mxu0 0
    %148 = vmatprep.subr.bf16.mxu0 0
    %149 = vmatpush1.bf16.msra.mxu0 0
    %150 = vmatprep.subr.bf16.mxu0 0
    %151 = vmatpush1.bf16.msra.mxu0 0
    %152 = vmatprep.mubr.bf16.mxu0 0
    %153 = vmatmul.mubr.bf16.gmra.mrb[0].mxu0 %v97
    %v154 = vpop.f32.mrb[0].mxu0
    %v155 = vadd.f32 %v41, %v154
    %v156 = vpop.f32.mrb[0].mxu0
    %v157 = vpop.f32.mrb[0].mxu0
    %v158 = vadd.f32 %v41, %v157
    %v159 = vpop.f32.mrb[0].mxu0
    %160 = vmatprep.mubr.bf16.mxu0 0
    %161 = vmatmul.mubr.bf16.gmra.mrb[0].mxu0 %v100
    %v162 = vpop.f32.mrb[0].mxu0
    %v163 = vadd.f32 %v41, %v162
    %v164 = vpop.f32.mrb[0].mxu0
    %v165 = vpop.f32.mrb[0].mxu0
    %v166 = vadd.f32 %v41, %v165
    %v167 = vpop.f32.mrb[0].mxu0
    %168 = vmatprep.mubr.bf16.mxu0 0
    %169 = vmatmul.mubr.bf16.gmra.mrb[0].mxu0 %v103
    %v170 = vpop.f32.mrb[0].mxu0
    %v171 = vadd.f32 %v41, %v170
    %v172 = vpop.f32.mrb[0].mxu0
    %v173 = vpop.f32.mrb[0].mxu0
    %v174 = vadd.f32 %v41, %v173
    %v175 = vpop.f32.mrb[0].mxu0
    %176 = vmatprep.mubr.bf16.mxu0 0
    %177 = vmatmul.mubr.bf16.gmra.mrb[0].mxu0 %v106
    %v178 = vpop.f32.mrb[0].mxu0
    %v179 = vadd.f32 %v41, %v178
    %v180 = vpop.f32.mrb[0].mxu0
    %v181 = vpop.f32.mrb[0].mxu0
    %v182 = vadd.f32 %v41, %v181
    %v183 = vpop.f32.mrb[0].mxu0
    %184 = vmatprep.mubr.bf16.mxu0 0
    %185 = vmatmul.mubr.bf16.gmra.mrb[0].mxu0 %v109
    %v186 = vpop.f32.mrb[0].mxu0
    %v187 = vadd.f32 %v41, %v186
    %v188 = vpop.f32.mrb[0].mxu0
    %v189 = vpop.f32.mrb[0].mxu0
    %v190 = vadd.f32 %v41, %v189
    %v191 = vpop.f32.mrb[0].mxu0
    %192 = vmatprep.mubr.bf16.mxu0 0
    %193 = vmatmul.mubr.bf16.gmra.mrb[0].mxu0 %v112
    %v194 = vpop.f32.mrb[0].mxu0
    %v195 = vadd.f32 %v41, %v194
    %v196 = vpop.f32.mrb[0].mxu0
    %v197 = vpop.f32.mrb[0].mxu0
    %v198 = vadd.f32 %v41, %v197
    %v199 = vpop.f32.mrb[0].mxu0
    %200 = vmatprep.mubr.bf16.mxu0 0
    %201 = vmatmul.mubr.bf16.gmra.mrb[0].mxu0 %v115
    %v202 = vpop.f32.mrb[0].mxu0
    %v203 = vadd.f32 %v41, %v202
    %v204 = vpop.f32.mrb[0].mxu0
    %v205 = vpop.f32.mrb[0].mxu0
    %v206 = vadd.f32 %v41, %v205
    %v207 = vpop.f32.mrb[0].mxu0
    %208 = vmatprep.mubr.bf16.mxu0 0
    %209 = vmatmul.mubr.bf16.gmra.mrb[0].mxu0 %v118
    %v210 = vpop.f32.mrb[0].mxu0
    %v211 = vadd.f32 %v41, %v210
    %v212 = vpop.f32.mrb[0].mxu0
    %v213 = vpop.f32.mrb[0].mxu0
    %v214 = vadd.f32 %v41, %v213
    %v215 = vpop.f32.mrb[0].mxu0
    %216 = vdwg.mxu0
    %v217 = vmax.f32 %v155, 0.0
    %v218 = vmax.f32 %v158, 0.0
    %v219 = vmax.f32 %v163, 0.0
    %v220 = vmax.f32 %v166, 0.0
    %v221 = vmax.f32 %v171, 0.0
    %v222 = vmax.f32 %v174, 0.0
    %v223 = vmax.f32 %v179, 0.0
    %v224 = vmax.f32 %v182, 0.0
    %v225 = vmax.f32 %v187, 0.0
    %v226 = vmax.f32 %v190, 0.0
    %v227 = vmax.f32 %v195, 0.0
    %v228 = vmax.f32 %v198, 0.0
    %v229 = vmax.f32 %v203, 0.0
    %v230 = vmax.f32 %v206, 0.0
    %v231 = vmax.f32 %v211, 0.0
    %v232 = vmax.f32 %v214, 0.0
    %v233 = vpack.c.bf16 %v218, %v217
    %v234 = vpack.c.bf16 %v220, %v219
    %v235 = vpack.c.bf16 %v222, %v221
    %v236 = vpack.c.bf16 %v224, %v223
    %v237 = vpack.c.bf16 %v226, %v225
    %v238 = vpack.c.bf16 %v228, %v227
    %v239 = vpack.c.bf16 %v230, %v229
    %v240 = vpack.c.bf16 %v232, %v231
    %v249 = vunpack.c.l.b16 %v233
    %v250 = vunpack.c.h.b16 %v233
    %v251 = vunpack.c.l.b16 %v234
    %v252 = vunpack.c.h.b16 %v234
    %v253 = vunpack.c.l.b16 %v235
    %v254 = vunpack.c.h.b16 %v235
    %v255 = vunpack.c.l.b16 %v236
    %v256 = vunpack.c.h.b16 %v236
    %v257 = vunpack.c.l.b16 %v237
    %v258 = vunpack.c.h.b16 %v237
    %v259 = vunpack.c.l.b16 %v238
    %v260 = vunpack.c.h.b16 %v238
    %v261 = vunpack.c.l.b16 %v239
    %v262 = vunpack.c.h.b16 %v239
    %v263 = vunpack.c.l.b16 %v240
    %v264 = vunpack.c.h.b16 %v240
    %v265 = vpack.c.b16 %v249, %v249
    %v266 = vpack.c.b16 %v250, %v250
    %v267 = vpack.c.b16 %v251, %v251
    %v268 = vpack.c.b16 %v252, %v252
    %v269 = vpack.c.b16 %v253, %v253
    %v270 = vpack.c.b16 %v254, %v254
    %v271 = vpack.c.b16 %v255, %v255
    %v272 = vpack.c.b16 %v256, %v256
    %v273 = vpack.c.b16 %v257, %v257
    %v274 = vpack.c.b16 %v258, %v258
    %v275 = vpack.c.b16 %v259, %v259
    %v276 = vpack.c.b16 %v260, %v260
    %v277 = vpack.c.b16 %v261, %v261
    %v278 = vpack.c.b16 %v262, %v262
    %v279 = vpack.c.b16 %v263, %v263
    %v280 = vpack.c.b16 %v264, %v264
    %297 = vst [vmem:[#allocation2] sm:$0xf] %v265
    %298 = vst [vmem:[#allocation2 + $0x4] sm:$0xf] %v266
    %299 = vst [vmem:[#allocation2 + $0x8] sm:$0xf] %v267
    %300 = vst [vmem:[#allocation2 + $0xc] sm:$0xf] %v268
    %301 = vst [vmem:[#allocation2 + $0x10] sm:$0xf] %v269
    %302 = vst [vmem:[#allocation2 + $0x14] sm:$0xf] %v270
    %303 = vst [vmem:[#allocation2 + $0x18] sm:$0xf] %v271
    %304 = vst [vmem:[#allocation2 + $0x1c] sm:$0xf] %v272
    %305 = vst [vmem:[#allocation2 + $0x20] sm:$0xf] %v273
    %306 = vst [vmem:[#allocation2 + $0x24] sm:$0xf] %v274
    %307 = vst [vmem:[#allocation2 + $0x28] sm:$0xf] %v275
    %308 = vst [vmem:[#allocation2 + $0x2c] sm:$0xf] %v276
    %309 = vst [vmem:[#allocation2 + $0x30] sm:$0xf] %v277
    %310 = vst [vmem:[#allocation2 + $0x34] sm:$0xf] %v278
    %311 = vst [vmem:[#allocation2 + $0x38] sm:$0xf] %v279
    %312 = vst [vmem:[#allocation2 + $0x3c] sm:$0xf] %v280
    // Predicated region
    $region14: #{tpu_custom_call.1} parent=1 // pred_check
      _
    $region15: #{tpu_custom_call.1} parent=1 // pred_check_branch
      %314 = sbr.rel (0) target = $region17
    $region16: #{tpu_custom_call.1} parent=1 // pred_region
      %s316 = ssub.s32 1024, 1024
      %317 = vsyncadd [#allocation3], %s316
      %s318 = sshll.u32 [#allocation2], 4
      %s319 = int_to_ptr.vmem [resolvable:$true] %s318
      %324 = dma.vmem_to_hbm [thread:$0]  %s319, 1024, %s3, [#allocation3], 64, 64, 4
    $region17: #{tpu_custom_call.1} parent=1 // pred_fallthru
      _
    // Predicated region
    $region18: #{tpu_custom_call.1} parent=1 // pred_check
      _
    $region19: #{tpu_custom_call.1} parent=1 // pred_check_branch
      %326 = sbr.rel (0) target = $region21
    $region20: #{tpu_custom_call.1} parent=1 // pred_region
      %327 = dma.done [#allocation3], 1024
    $region21: #{tpu_custom_call.1} parent=1 // pred_fallthru
      _
    %328 = vsyncpa [#allocation3], 1

</llo_original>
